<compile_context>
chip_gen: v7x
topology: tpu7x:2x2x1
jax: 0.10.0
libtpu: 0.0.40
codegen_flags: <defaults>
</compile_context>

<pallas_src>
import functools
import math

import jax
import jax.numpy as jnp
from jax.experimental import pallas as pl
from jax.experimental.pallas import tpu as pltpu


def _bias_gelu_kernel(x_ref, b_ref, o_ref, *, compute_dtype):
    """One grid step = one (tm, W) row tile: out = gelu(x + bias)."""
    x = x_ref[...].astype(compute_dtype)
    b = b_ref[...].astype(compute_dtype)          # (1, W), broadcasts over rows
    o_ref[...] = jax.nn.gelu(x + b, approximate=True).astype(o_ref.dtype)


def _bias_gelu_dropout_kernel(x_ref, b_ref, u_ref, o_ref, *, p, compute_dtype):
    """One grid step: out = inverted_dropout(gelu(x + bias), p)."""
    x = x_ref[...].astype(compute_dtype)
    b = b_ref[...].astype(compute_dtype)
    y = jax.nn.gelu(x + b, approximate=True)
    # Inverted dropout: keep with prob (1 - p), scale kept values by 1/(1 - p).
    keep = u_ref[...] >= p                         # P(u >= p) = 1 - p
    scale = 1.0 / (1.0 - p)
    y = jnp.where(keep, y * scale, jnp.zeros_like(y))
    o_ref[...] = y.astype(o_ref.dtype)


def fused_bias_act_dropout(x, bias=None, *, p=0.1, seed=0, training=True):
    """dropout(gelu(x + bias), p) with the fused hot path in Pallas."""
    assert p < 1.0, f"p={p} would drop everything"
    orig_shape = x.shape
    H = orig_shape[-1]
    if bias is None:
        bias = jnp.zeros((H,), dtype=x.dtype)

    x2 = x.reshape(-1, H)
    R = x2.shape[0]

    # Lane-dense fold: if H is not a multiple of 128, fold G consecutive rows
    # into the lane dim so the output block last dim is a multiple of 128.
    if H % 128 != 0:
        G = 128 // math.gcd(H, 128)
        if G > 1 and R % G == 0:
            x2 = x2.reshape(R // G, G * H)
            bias_row = jnp.tile(bias.reshape(-1), G).reshape(1, G * H)
        else:
            bias_row = bias.reshape(1, H)
    else:
        bias_row = bias.reshape(1, H)
    R2, W = x2.shape

    compute_dtype = jnp.bfloat16 if x.dtype == jnp.bfloat16 else jnp.float32

    # Row-tile sizing: target ~2 MiB per x tile (multi-step grid -> pipelining;
    # double-buffered footprint stays well under 16 MiB scoped VMEM on all of
    # v5e / v6e / v7x).
    itemsize = x2.dtype.itemsize
    target_tile_bytes = 2 * 1024 * 1024
    tm = max(8, (target_tile_bytes // max(1, W * itemsize)) // 8 * 8)
    tm = min(tm, R2)                     # tm < R2 -> multiple of 8; else full dim
    grid = (pl.cdiv(R2, tm),)

    apply_dropout = bool(training) and float(p) > 0.0

    # Explicit scoped-VMEM budget: 2x double-buffered (in + rand + out) + bias.
    tile_x = tm * W * itemsize
    tile_u = tm * W * 4 if apply_dropout else 0
    needed = 2 * (2 * tile_x + tile_u) + W * itemsize + (2 << 20)
    vmem_limit = int(min(max(needed, 16 << 20), 64 << 20))

    row_spec = pl.BlockSpec((tm, W), lambda i: (i, 0))
    bias_spec = pl.BlockSpec((1, W), lambda i: (0, 0))

    if apply_dropout:
        key = jax.random.PRNGKey(seed)
        u = jax.random.uniform(key, (R2, W), dtype=jnp.float32)
        kernel = functools.partial(
            _bias_gelu_dropout_kernel, p=float(p), compute_dtype=compute_dtype
        )
        in_specs = [row_spec, bias_spec, row_spec]
        args = (x2, bias_row, u)
    else:
        kernel = functools.partial(_bias_gelu_kernel, compute_dtype=compute_dtype)
        in_specs = [row_spec, bias_spec]
        args = (x2, bias_row)

    out = pl.pallas_call(
        kernel,
        out_shape=jax.ShapeDtypeStruct((R2, W), x.dtype),
        grid=grid,
        in_specs=in_specs,
        out_specs=row_spec,
        compiler_params=pltpu.CompilerParams(
            dimension_semantics=("parallel",),
            vmem_limit_bytes=vmem_limit,
        ),
    )(*args)

    return out.reshape(orig_shape)


if __name__ == "__main__":
    # Module config: p=0.1, activation=GELU, bias_shape=hidden.
    B, S, H = 2, 8, 32
    p = 0.1

    key = jax.random.PRNGKey(0)
    kx, kb = jax.random.split(key)
    x = jax.random.normal(kx, (B, S, H), dtype=jnp.float32)
    bias = 0.1 * jax.random.normal(kb, (H,), dtype=jnp.float32)

    # Training-mode forward (dropout active).
    y_train = fused_bias_act_dropout(x, bias, p=p, seed=0, training=True)
    y_train = jax.block_until_ready(y_train)

    # Eval-mode forward (p -> 0, pure bias + activation).
    y_eval = fused_bias_act_dropout(x, bias, p=p, seed=0, training=False)
    y_eval = jax.block_until_ready(y_eval)

    ref = jax.nn.gelu(x + bias, approximate=True)
    assert jnp.allclose(y_eval, ref, atol=1e-5, rtol=1e-5)
    assert y_train.shape == x.shape and y_train.dtype == x.dtype

    # Every training-mode element is either dropped (0) or ref / (1 - p).
    scale = 1.0 / (1.0 - p)
    ok = jnp.isclose(y_train, ref * scale, atol=1e-5) | jnp.isclose(
        y_train, 0.0, atol=1e-6
    )
    assert bool(jnp.all(ok))

    print("KERNEL_OK")
</pallas_src>

<mosaic_0001>
module attributes {stable_mosaic.version = 11 : i64} {
  func.func @_bias_gelu_dropout_kernel(%arg0: i32, %arg1: memref<4x128xf32, #tpu.memory_space<vmem>>, %arg2: memref<1x128xf32, #tpu.memory_space<vmem>>, %arg3: memref<4x128xf32, #tpu.memory_space<vmem>>, %arg4: memref<4x128xf32, #tpu.memory_space<vmem>>) attributes {dimension_semantics = [#tpu.dimension_semantics<parallel>], iteration_bounds = array<i64: 1>, scalar_prefetch = 0 : i64, scratch_operands = 0 : i64, tpu.core_type = #tpu.core_type<tc>, window_params = [{transform_indices = @transform_0, window_bounds = array<i64: 4, 128>}, {pipeline_mode = #tpu.pipeline_mode<synchronous>, transform_indices = @transform_1, window_bounds = array<i64: 1, 128>}, {transform_indices = @transform_2, window_bounds = array<i64: 4, 128>}, {transform_indices = @transform_3, window_bounds = array<i64: 4, 128>}]} {
    %c0 = arith.constant 0 : index
    %c0_0 = arith.constant 0 : index
    %0 = vector.load %arg1[%c0, %c0_0] : memref<4x128xf32, #tpu.memory_space<vmem>>, vector<4x128xf32>
    %c0_1 = arith.constant 0 : index
    %c0_2 = arith.constant 0 : index
    %1 = vector.load %arg2[%c0_1, %c0_2] : memref<1x128xf32, #tpu.memory_space<vmem>>, vector<1x128xf32>
    %2 = vector.broadcast %1 : vector<1x128xf32> to vector<4x128xf32>
    %3 = arith.addf %0, %2 : vector<4x128xf32>
    %4 = arith.mulf %3, %3 : vector<4x128xf32>
    %5 = arith.mulf %3, %4 : vector<4x128xf32>
    %cst = arith.constant 4.471500e-02 : f32
    %6 = vector.broadcast %cst : f32 to vector<4x128xf32>
    %7 = arith.mulf %6, %5 : vector<4x128xf32>
    %8 = arith.addf %3, %7 : vector<4x128xf32>
    %cst_3 = arith.constant 0.797884583 : f32
    %9 = vector.broadcast %cst_3 : f32 to vector<4x128xf32>
    %10 = arith.mulf %9, %8 : vector<4x128xf32>
    %11 = math.tanh %10 : vector<4x128xf32>
    %cst_4 = arith.constant 1.000000e+00 : f32
    %12 = vector.broadcast %cst_4 : f32 to vector<4x128xf32>
    %13 = arith.addf %12, %11 : vector<4x128xf32>
    %cst_5 = arith.constant 5.000000e-01 : f32
    %14 = vector.broadcast %cst_5 : f32 to vector<4x128xf32>
    %15 = arith.mulf %14, %13 : vector<4x128xf32>
    %16 = arith.mulf %3, %15 : vector<4x128xf32>
    %c0_6 = arith.constant 0 : index
    %c0_7 = arith.constant 0 : index
    %17 = vector.load %arg3[%c0_6, %c0_7] : memref<4x128xf32, #tpu.memory_space<vmem>>, vector<4x128xf32>
    %cst_8 = arith.constant 1.000000e-01 : f32
    %18 = vector.broadcast %cst_8 : f32 to vector<4x128xf32>
    %19 = arith.cmpf oge, %17, %18 : vector<4x128xf32>
    %cst_9 = arith.constant 1.11111116 : f32
    %20 = vector.broadcast %cst_9 : f32 to vector<4x128xf32>
    %21 = arith.mulf %16, %20 : vector<4x128xf32>
    %cst_10 = arith.constant 0.000000e+00 : f32
    %22 = vector.broadcast %cst_10 : f32 to vector<4x128xf32>
    %23 = arith.select %19, %21, %22 : vector<4x128xi1>, vector<4x128xf32>
    %c0_11 = arith.constant 0 : index
    %c0_12 = arith.constant 0 : index
    %24 = vector.load %arg4[%c0_11, %c0_12] : memref<4x128xf32, #tpu.memory_space<vmem>>, vector<4x128xf32>
    tpu.vector_store %arg4[%c0_11, %c0_12], %23 {strides = array<i32>} : memref<4x128xf32, #tpu.memory_space<vmem>>, vector<4x128xf32>,
    return
  }
  func.func @transform_0(%arg0: i32) -> (i32, i32) {
    %c0_i32 = arith.constant 0 : i32
    %c0_i32_0 = arith.constant 0 : i32
    return %arg0, %c0_i32 : i32, i32
  }
  func.func @transform_1(%arg0: i32) -> (i32, i32) {
    %c0_i32 = arith.constant 0 : i32
    %c0_i32_0 = arith.constant 0 : i32
    %c0_i32_1 = arith.constant 0 : i32
    return %c0_i32, %c0_i32_0 : i32, i32
  }
  func.func @transform_2(%arg0: i32) -> (i32, i32) {
    %c0_i32 = arith.constant 0 : i32
    %c0_i32_0 = arith.constant 0 : i32
    return %arg0, %c0_i32 : i32, i32
  }
  func.func @transform_3(%arg0: i32) -> (i32, i32) {
    %c0_i32 = arith.constant 0 : i32
    %c0_i32_0 = arith.constant 0 : i32
    return %arg0, %c0_i32 : i32, i32
  }
}

</mosaic_0001>

<llo_original>
// kernel: tpu_custom_call.1
$region0: #{tpu_custom_call.1}
  #allocation0 [shape = 'u32[]', space=smem, size = 0x4, offset = 0x4, fixed_abs, tag = 'smem constant byte address 0x4 - core index']
  #allocation1 [shape = 'u32[144,128]{1,0:T(1,128)}', space=vmem, size = 0x12000, scoped, tag = 'internal scratch']
  %s0 = inlined_call_operand.hbm [shape: f32[4,128], index: 0, kind: input, shape index: {}]
  %s1 = inlined_call_operand.vmem [shape: f32[1,128], index: 1, kind: input, shape index: {}]
  %s2 = inlined_call_operand.vmem [shape: f32[4,128], index: 2, kind: input, shape index: {}]
  %s3 = inlined_call_operand.hbm [shape: f32[4,128], index: 3, kind: output, shape index: {}]
  %s4 = sld [smem:[#allocation0]]
  $region26: #{tpu_custom_call.1} parent=0
    _
  %s6 = ssub.s32 1, %s4
  %s7 = scalar_select 0, %s6, %s4
  $region1: #{tpu_custom_call.1} parent=0
    #allocation2 [shape = 'u8[2048]{0}', space=vmem, size = 0x800, scoped, tag = 'input window, operand 0, single buffered']
    #allocation3 [shape = 's32[1]{0}', space=sflag, size = 0x4, scoped, tag = 'scoped memory for tpu_custom_call.1']
    #allocation4 [shape = 's32[1]{0}', space=sflag, size = 0x4, scoped, tag = 'scoped memory for tpu_custom_call.1']
    #allocation5 [shape = 'u8[2048]{0}', space=vmem, size = 0x800, scoped, tag = 'output window, operand 0, single buffered']
    %8 = vsyncpa [#allocation3], 0
    %9 = vsyncpa [#allocation4], 0
    // Predicated region
    $region2: #{tpu_custom_call.1} parent=1 // pred_check
      _
    $region3: #{tpu_custom_call.1} parent=1 // pred_check_branch
      %11 = sbr.rel (0) target = $region5
    $region4: #{tpu_custom_call.1} parent=1 // pred_region
      %s13 = ssub.s32 64, 64
      %14 = vsyncadd [#allocation3], %s13
      %s16 = sshll.u32 [#allocation2], 4
      %s17 = int_to_ptr.vmem [resolvable:$true] %s16
      %19 = dma.hbm_to_vmem [thread:$0]  %s0, 64, %s17, [#allocation3]
    $region5: #{tpu_custom_call.1} parent=1 // pred_fallthru
      _
    // Predicated region
    $region6: #{tpu_custom_call.1} parent=1 // pred_check
      _
    $region7: #{tpu_custom_call.1} parent=1 // pred_check_branch
      %21 = sbr.rel (0) target = $region9
    $region8: #{tpu_custom_call.1} parent=1 // pred_region
      _
    $region9: #{tpu_custom_call.1} parent=1 // pred_fallthru
      _
    // Predicated region
    $region10: #{tpu_custom_call.1} parent=1 // pred_check
      _
    $region11: #{tpu_custom_call.1} parent=1 // pred_check_branch
      %23 = sbr.rel (0) target = $region13
    $region12: #{tpu_custom_call.1} parent=1 // pred_region
      _
    $region13: #{tpu_custom_call.1} parent=1 // pred_fallthru
      _
    // Predicated region
    $region14: #{tpu_custom_call.1} parent=1 // pred_check
      _
    $region15: #{tpu_custom_call.1} parent=1 // pred_check_branch
      %25 = sbr.rel (0) target = $region17
    $region16: #{tpu_custom_call.1} parent=1 // pred_region
      %26 = dma.done [#allocation3], 64
    $region17: #{tpu_custom_call.1} parent=1 // pred_fallthru
      _
    %v27 = vld [vmem:[#allocation2] sm:$0xf]
    %v28 = vld [vmem:[%s1] sm:$0x1]
    %v30 = vlaneseq
    %v31 = vshrl.u32 %v30, 7
    %v32 = vsub.s32 0, %v31
    %v33 = vrot.slane %v28, %v32
    %v35 = vadd.f32 %v27, %v33
    %v36 = vmul.f32 %v35, %v35
    %v37 = vmul.f32 %v35, %v36
    %v38 = vmul.f32 %v37, 0.044715
    %v39 = vadd.f32 %v35, %v38
    %v40 = vmul.f32 %v39, 0.7978846
    %v41 = vtanh.pop %v40
    %v42 = vadd.f32 %v41, 1.0
    %v43 = vmul.f32 %v42, 0.5
    %v44 = vmul.f32 %v35, %v43
    %v45 = vld [vmem:[%s2] sm:$0xf]
    %vm46 = vcmp.ge.f32.partialorder %v45, 0.1
    %v47 = vmul.f32 %v44, 1.1111112
    %v48 = vsel %vm46, %v47, 0.0
    %49 = vst [vmem:[#allocation5] sm:$0xf] %v48
    // Predicated region
    $region18: #{tpu_custom_call.1} parent=1 // pred_check
      _
    $region19: #{tpu_custom_call.1} parent=1 // pred_check_branch
      %51 = sbr.rel (0) target = $region21
    $region20: #{tpu_custom_call.1} parent=1 // pred_region
      %s53 = ssub.s32 64, 64
      %54 = vsyncadd [#allocation4], %s53
      %s56 = sshll.u32 [#allocation5], 4
      %s57 = int_to_ptr.vmem [resolvable:$true] %s56
      %59 = dma.vmem_to_hbm [thread:$0]  %s57, 64, %s3, [#allocation4]
    $region21: #{tpu_custom_call.1} parent=1 // pred_fallthru
      _
    // Predicated region
    $region22: #{tpu_custom_call.1} parent=1 // pred_check
      _
    $region23: #{tpu_custom_call.1} parent=1 // pred_check_branch
      %61 = sbr.rel (0) target = $region25
    $region24: #{tpu_custom_call.1} parent=1 // pred_region
      %62 = dma.done [#allocation4], 64
    $region25: #{tpu_custom_call.1} parent=1 // pred_fallthru
      _
    %63 = vsyncpa [#allocation3], 1
    %64 = vsyncpa [#allocation4], 1

</llo_original>
